<compile_context>
chip_gen: v5e
topology: v5e:2x2
jax: 0.10.0
libtpu: 0.0.40
codegen_flags: <defaults>
</compile_context>

<pallas_src>
import jax
import jax.numpy as jnp
from jax.experimental import pallas as pl
from jax.experimental.pallas import tpu as pltpu

GAMMA = 1.5          # implemented exactly as m * sqrt(m)
ALPHA = 0.25
LANES = 128


def _focal_elementwise(x, y):
    """Elementwise focal BCE-with-logits loss (f32 in, f32 out)."""
    # Single transcendental shared by BCE and sigmoid.
    e = jnp.exp(-jnp.abs(x))

    # Numerically stable BCE with logits (reduction='none'):
    #   max(x, 0) - x*y + log(1 + exp(-|x|))
    bce = jnp.maximum(x, 0.0) - x * y + jnp.log1p(e)

    # sigmoid(x) from the shared exp: x>=0 -> 1/(1+e), x<0 -> e/(1+e).
    r = pl.reciprocal(1.0 + e, approx=True)          # EUP approximate recip
    p = r * jnp.where(x >= 0.0, 1.0, e)

    # 1 - p_t  ==  p + y - 2*p*y   (saves forming p_t then subtracting)
    m = jnp.maximum(p + y - 2.0 * (p * y), 0.0)      # clamp: approx recip overshoot
    modulating = m * jnp.sqrt(m)                     # m ** 1.5, no exp/log pair

    # y*a + (1-y)*(1-a)  ==  (1-a) - (1-2a)*y
    alpha_factor = (1.0 - ALPHA) - (1.0 - 2.0 * ALPHA) * y

    return bce * alpha_factor * modulating


def _make_kernel(tm, chunks_per_split, n_elem):
    tile_elems = tm * LANES

    def kernel(pred_ref, true_ref, out_ref):
        c = pl.program_id(0)          # split ("parallel" / core-parallel) axis
        i = pl.program_id(1)          # reduction ("arbitrary") axis

        @pl.when(i == 0)
        def _():
            out_ref[...] = jnp.zeros_like(out_ref)

        x = pred_ref[...].astype(jnp.float32)
        y = true_ref[...].astype(jnp.float32)

        # Valid elements remaining from this tile's first element onward.
        # (n_elem, tm, chunks_per_split are static trace-time constants.)
        g = c * chunks_per_split + i
        rem = n_elem - g * tile_elems

        @pl.when(rem >= tile_elems)
        def _():
            # Fast path: whole tile valid -> zero masking overhead.
            loss = _focal_elementwise(x, y)
            out_ref[...] += loss.reshape(-1, 8, LANES).sum(axis=0)

        @pl.when(rem < tile_elems)
        def _():
            # Boundary / dummy tile: OOB block contents are undefined, so mask
            # the inputs to benign values *before* any transcendental and the
            # loss to exactly zero before accumulating.
            idx = (jax.lax.broadcasted_iota(jnp.int32, (tm, LANES), 0) * LANES
                   + jax.lax.broadcasted_iota(jnp.int32, (tm, LANES), 1))
            valid = idx < rem
            xs = jnp.where(valid, x, 0.0)
            ys = jnp.where(valid, y, 1.0)
            loss = jnp.where(valid, _focal_elementwise(xs, ys), 0.0)
            out_ref[...] += loss.reshape(-1, 8, LANES).sum(axis=0)

    return kernel


def focal_loss(pred, true, *, tm=4096, num_splits=2, core_parallel=False):
    """FocalLoss(BCEWithLogitsLoss(reduction='mean'), gamma=1.5, alpha=0.25).

    core_parallel=True maps the split axis to pltpu.CORE_PARALLEL (use on v7x
    where the chip has two TensorCores); leave False on v5e/v6e.
    """
    assert pred.shape == true.shape
    n_elem = int(pred.size)
    rows = pl.cdiv(n_elem, LANES)

    # Sublane packing for the narrowest input dtype (f32->8, bf16->16, i8->32).
    itemsize = min(jnp.dtype(pred.dtype).itemsize, jnp.dtype(true.dtype).itemsize)
    row_align = max(8, 32 // itemsize)

    # ---- flatten; pad only the <128-element tail needed for the reshape -----
    flat_pred = pred.reshape(-1)
    flat_true = true.reshape(-1)
    tail_pad = rows * LANES - n_elem
    if tail_pad:  # <= 127 elements; values are irrelevant (masked in-kernel)
        flat_pred = jnp.pad(flat_pred, (0, tail_pad))
        flat_true = jnp.pad(flat_true, (0, tail_pad))
    pred2 = flat_pred.reshape(rows, LANES)
    true2 = flat_true.reshape(rows, LANES)

    # Don't bother splitting tiny inputs.
    if rows < num_splits * row_align:
        num_splits = 1

    rows_per_split = pl.cdiv(rows, num_splits)
    tm = max(row_align, min(tm, pl.cdiv(rows_per_split, row_align) * row_align))
    total_chunks = pl.cdiv(rows, tm)              # chunks that contain real data
    chunks_per_split = pl.cdiv(total_chunks, num_splits)

    def in_map(c, i):
        g = c * chunks_per_split + i
        # Clamp so "dummy" grid steps past the end re-read the last real tile
        # (never a fully out-of-bounds DMA); their contribution is masked to 0.
        return (jnp.minimum(g, total_chunks - 1), 0)

    kernel = _make_kernel(tm, chunks_per_split, n_elem)

    split_sem = (pltpu.CORE_PARALLEL
                 if (core_parallel and num_splits > 1) else "parallel")

    partials = pl.pallas_call(
        kernel,
        out_shape=jax.ShapeDtypeStruct((num_splits, 8, LANES), jnp.float32),
        grid_spec=pltpu.PrefetchScalarGridSpec(
            num_scalar_prefetch=0,
            grid=(num_splits, chunks_per_split),
            in_specs=[
                pl.BlockSpec((tm, LANES), in_map),
                pl.BlockSpec((tm, LANES), in_map),
            ],
            # One (8,128) vreg-shaped accumulator block per split.
            out_specs=pl.BlockSpec((None, 8, LANES), lambda c, i: (c, 0, 0)),
        ),
        compiler_params=pltpu.CompilerParams(
            dimension_semantics=(split_sem, "arbitrary"),
            vmem_limit_bytes=32 * 1024 * 1024,
        ),
    )(pred2, true2)

    # Final tiny cross-lane reduce + 'mean' in plain JAX.
    return (jnp.sum(partials) / n_elem).astype(jnp.float32)


def _focal_loss_ref(pred, true):
    x = pred.astype(jnp.float32)
    y = true.astype(jnp.float32)
    bce = jnp.maximum(x, 0.0) - x * y + jnp.log1p(jnp.exp(-jnp.abs(x)))
    p = jax.nn.sigmoid(x)
    p_t = y * p + (1 - y) * (1 - p)
    af = y * ALPHA + (1 - y) * (1 - ALPHA)
    loss = bce * af * (1.0 - p_t) ** GAMMA
    return jnp.mean(loss)


if __name__ == "__main__":
    key = jax.random.PRNGKey(0)
    k1, k2, k3, k4 = jax.random.split(key, 4)

    # NCHW-shaped synthetic logits/targets, like a yolov5 objectness/cls map.
    shape = (2, 4, 16, 16)
    pred = jax.random.normal(k1, shape, dtype=jnp.float32)
    true = (jax.random.uniform(k2, shape) > 0.5).astype(jnp.float32)

    out = jax.block_until_ready(focal_loss(pred, true))
    ref = _focal_loss_ref(pred, true)
    # Tolerance accounts for the EUP approximate reciprocal used for sigmoid;
    # everything else is exact f32.
    assert jnp.allclose(out, ref, rtol=5e-3, atol=1e-5), (out, ref)

    # Awkward shape that exercises the in-kernel masking (128-remainder tail
    # plus a partially out-of-bounds boundary tile).
    shape2 = (2, 3, 7, 5)
    pred2 = jax.random.normal(k3, shape2, dtype=jnp.float32)
    true2 = (jax.random.uniform(k4, shape2) > 0.5).astype(jnp.float32)
    out2 = jax.block_until_ready(focal_loss(pred2, true2))
    ref2 = _focal_loss_ref(pred2, true2)
    assert jnp.allclose(out2, ref2, rtol=5e-3, atol=1e-5), (out2, ref2)

    # bf16 inputs (half HBM traffic on mem-bound v5e/v6e); compute stays f32.
    pred_bf = pred.astype(jnp.bfloat16)
    true_bf = true.astype(jnp.bfloat16)
    out3 = jax.block_until_ready(focal_loss(pred_bf, true_bf))
    ref3 = _focal_loss_ref(pred_bf.astype(jnp.float32), true_bf.astype(jnp.float32))
    assert jnp.allclose(out3, ref3, rtol=5e-3, atol=1e-5), (out3, ref3)

    print("KERNEL_OK")
</pallas_src>

<mosaic_0001>
module attributes {stable_mosaic.version = 11 : i64} {
  func.func @kernel(%arg0: i32, %arg1: i32, %arg2: memref<8x128xf32, #tpu.memory_space<vmem>>, %arg3: memref<8x128xf32, #tpu.memory_space<vmem>>, %arg4: memref<1x8x128xf32, #tpu.memory_space<vmem>>) attributes {dimension_semantics = [#tpu.dimension_semantics<parallel>, #tpu.dimension_semantics<arbitrary>], iteration_bounds = array<i64: 2, 1>, scalar_prefetch = 0 : i64, scratch_operands = 0 : i64, tpu.core_type = #tpu.core_type<tc>, window_params = [{transform_indices = @transform_0, window_bounds = array<i64: 8, 128>}, {transform_indices = @transform_1, window_bounds = array<i64: 8, 128>}, {transform_indices = @transform_2, window_bounds = array<i64: 1, 8, 128>}]} {
    %c0_i32 = arith.constant 0 : i32
    %0 = arith.cmpi eq, %arg1, %c0_i32 : i32
    %1 = arith.extui %0 : i1 to i32
    %c0_i32_0 = arith.constant 0 : i32
    %2 = arith.cmpi ne, %1, %c0_i32_0 : i32
    scf.if %2 {
      %cst = arith.constant 0.000000e+00 : f32
      %15 = vector.broadcast %cst : f32 to vector<8x128xf32>
      %c0_8 = arith.constant 0 : index
      %c0_9 = arith.constant 0 : index
      %c0_10 = arith.constant 0 : index
      %16 = vector.load %arg4[%c0_8, %c0_9, %c0_10] : memref<1x8x128xf32, #tpu.memory_space<vmem>>, vector<1x8x128xf32>
      %17 = vector.shape_cast %16 : vector<1x8x128xf32> to vector<8x128xf32>
      %18 = vector.shape_cast %15 : vector<8x128xf32> to vector<1x8x128xf32>
      tpu.vector_store %arg4[%c0_8, %c0_9, %c0_10], %18 {strides = array<i32>} : memref<1x8x128xf32, #tpu.memory_space<vmem>>, vector<1x8x128xf32>,
    } else {
    }
    %c0 = arith.constant 0 : index
    %c0_1 = arith.constant 0 : index
    %3 = vector.load %arg2[%c0, %c0_1] : memref<8x128xf32, #tpu.memory_space<vmem>>, vector<8x128xf32>
    %c0_2 = arith.constant 0 : index
    %c0_3 = arith.constant 0 : index
    %4 = vector.load %arg3[%c0_2, %c0_3] : memref<8x128xf32, #tpu.memory_space<vmem>>, vector<8x128xf32>
    %c1_i32 = arith.constant 1 : i32
    %5 = arith.muli %arg0, %c1_i32 : i32
    %6 = arith.addi %5, %arg1 : i32
    %c1024_i32 = arith.constant 1024 : i32
    %7 = arith.muli %6, %c1024_i32 : i32
    %c2048_i32 = arith.constant 2048 : i32
    %8 = arith.subi %c2048_i32, %7 : i32
    %c1024_i32_4 = arith.constant 1024 : i32
    %9 = arith.cmpi sge, %8, %c1024_i32_4 : i32
    %10 = arith.extui %9 : i1 to i32
    %c0_i32_5 = arith.constant 0 : i32
    %11 = arith.cmpi ne, %10, %c0_i32_5 : i32
    scf.if %11 {
      %15 = math.absf %3 : vector<8x128xf32>
      %cst = arith.constant 0.000000e+00 : f32
      %16 = vector.broadcast %cst : f32 to vector<8x128xf32>
      %17 = arith.subf %16, %15 : vector<8x128xf32>
      %18 = math.exp %17 : vector<8x128xf32>
      %cst_8 = arith.constant 0.000000e+00 : f32
      %19 = vector.broadcast %cst_8 : f32 to vector<8x128xf32>
      %20 = arith.maximumf %3, %19 : vector<8x128xf32>
      %21 = arith.mulf %3, %4 : vector<8x128xf32>
      %22 = arith.subf %20, %21 : vector<8x128xf32>
      %23 = math.log1p %18 : vector<8x128xf32>
      %24 = arith.addf %22, %23 : vector<8x128xf32>
      %cst_9 = arith.constant 1.000000e+00 : f32
      %25 = vector.broadcast %cst_9 : f32 to vector<8x128xf32>
      %26 = arith.addf %25, %18 : vector<8x128xf32>
      %27 = tpu.reciprocal %26 {approx = true} : vector<8x128xf32> -> vector<8x128xf32>
      %cst_10 = arith.constant 0.000000e+00 : f32
      %28 = vector.broadcast %cst_10 : f32 to vector<8x128xf32>
      %29 = arith.cmpf oge, %3, %28 : vector<8x128xf32>
      %cst_11 = arith.constant 1.000000e+00 : f32
      %30 = vector.broadcast %cst_11 : f32 to vector<8x128xf32>
      %31 = arith.select %29, %30, %18 : vector<8x128xi1>, vector<8x128xf32>
      %32 = arith.mulf %27, %31 : vector<8x128xf32>
      %33 = arith.addf %32, %4 : vector<8x128xf32>
      %34 = arith.mulf %32, %4 : vector<8x128xf32>
      %cst_12 = arith.constant 2.000000e+00 : f32
      %35 = vector.broadcast %cst_12 : f32 to vector<8x128xf32>
      %36 = arith.mulf %35, %34 : vector<8x128xf32>
      %37 = arith.subf %33, %36 : vector<8x128xf32>
      %cst_13 = arith.constant 0.000000e+00 : f32
      %38 = vector.broadcast %cst_13 : f32 to vector<8x128xf32>
      %39 = arith.maximumf %37, %38 : vector<8x128xf32>
      %40 = math.sqrt %39 : vector<8x128xf32>
      %41 = arith.mulf %39, %40 : vector<8x128xf32>
      %cst_14 = arith.constant 5.000000e-01 : f32
      %42 = vector.broadcast %cst_14 : f32 to vector<8x128xf32>
      %43 = arith.mulf %42, %4 : vector<8x128xf32>
      %cst_15 = arith.constant 7.500000e-01 : f32
      %44 = vector.broadcast %cst_15 : f32 to vector<8x128xf32>
      %45 = arith.subf %44, %43 : vector<8x128xf32>
      %46 = arith.mulf %24, %45 : vector<8x128xf32>
      %47 = arith.mulf %46, %41 : vector<8x128xf32>
      %c0_16 = arith.constant 0 : index
      %c0_17 = arith.constant 0 : index
      %c0_18 = arith.constant 0 : index
      %48 = vector.load %arg4[%c0_16, %c0_17, %c0_18] : memref<1x8x128xf32, #tpu.memory_space<vmem>>, vector<1x8x128xf32>
      %49 = vector.shape_cast %48 : vector<1x8x128xf32> to vector<8x128xf32>
      %50 = vector.shape_cast %47 : vector<8x128xf32> to vector<1x8x128xf32>
      %cst_19 = arith.constant dense<0.000000e+00> : vector<8x128xf32>
      %51 = vector.multi_reduction <add>, %50, %cst_19 [0] : vector<1x8x128xf32> to vector<8x128xf32>
      %52 = arith.addf %49, %51 : vector<8x128xf32>
      %c0_20 = arith.constant 0 : index
      %c0_21 = arith.constant 0 : index
      %c0_22 = arith.constant 0 : index
      %53 = vector.load %arg4[%c0_20, %c0_21, %c0_22] : memref<1x8x128xf32, #tpu.memory_space<vmem>>, vector<1x8x128xf32>
      %54 = vector.shape_cast %53 : vector<1x8x128xf32> to vector<8x128xf32>
      %55 = vector.shape_cast %52 : vector<8x128xf32> to vector<1x8x128xf32>
      tpu.vector_store %arg4[%c0_20, %c0_21, %c0_22], %55 {strides = array<i32>} : memref<1x8x128xf32, #tpu.memory_space<vmem>>, vector<1x8x128xf32>,
    } else {
    }
    %c1024_i32_6 = arith.constant 1024 : i32
    %12 = arith.cmpi slt, %8, %c1024_i32_6 : i32
    %13 = arith.extui %12 : i1 to i32
    %c0_i32_7 = arith.constant 0 : i32
    %14 = arith.cmpi ne, %13, %c0_i32_7 : i32
    scf.if %14 {
      %15 = tpu.iota {dimensions = array<i32: 0>} : vector<8x128xi32>
      %c128_i32 = arith.constant 128 : i32
      %16 = vector.broadcast %c128_i32 : i32 to vector<8x128xi32>
      %17 = arith.muli %15, %16 : vector<8x128xi32>
      %18 = tpu.iota {dimensions = array<i32: 1>} : vector<8x128xi32>
      %19 = arith.addi %17, %18 : vector<8x128xi32>
      %20 = vector.broadcast %8 : i32 to vector<8x128xi32>
      %21 = arith.cmpi slt, %19, %20 : vector<8x128xi32>
      %cst = arith.constant 0.000000e+00 : f32
      %22 = vector.broadcast %cst : f32 to vector<8x128xf32>
      %23 = arith.select %21, %3, %22 : vector<8x128xi1>, vector<8x128xf32>
      %cst_8 = arith.constant 1.000000e+00 : f32
      %24 = vector.broadcast %cst_8 : f32 to vector<8x128xf32>
      %25 = arith.select %21, %4, %24 : vector<8x128xi1>, vector<8x128xf32>
      %26 = math.absf %23 : vector<8x128xf32>
      %cst_9 = arith.constant 0.000000e+00 : f32
      %27 = vector.broadcast %cst_9 : f32 to vector<8x128xf32>
      %28 = arith.subf %27, %26 : vector<8x128xf32>
      %29 = math.exp %28 : vector<8x128xf32>
      %cst_10 = arith.constant 0.000000e+00 : f32
      %30 = vector.broadcast %cst_10 : f32 to vector<8x128xf32>
      %31 = arith.maximumf %23, %30 : vector<8x128xf32>
      %32 = arith.mulf %23, %25 : vector<8x128xf32>
      %33 = arith.subf %31, %32 : vector<8x128xf32>
      %34 = math.log1p %29 : vector<8x128xf32>
      %35 = arith.addf %33, %34 : vector<8x128xf32>
      %cst_11 = arith.constant 1.000000e+00 : f32
      %36 = vector.broadcast %cst_11 : f32 to vector<8x128xf32>
      %37 = arith.addf %36, %29 : vector<8x128xf32>
      %38 = tpu.reciprocal %37 {approx = true} : vector<8x128xf32> -> vector<8x128xf32>
      %cst_12 = arith.constant 0.000000e+00 : f32
      %39 = vector.broadcast %cst_12 : f32 to vector<8x128xf32>
      %40 = arith.cmpf oge, %23, %39 : vector<8x128xf32>
      %cst_13 = arith.constant 1.000000e+00 : f32
      %41 = vector.broadcast %cst_13 : f32 to vector<8x128xf32>
      %42 = arith.select %40, %41, %29 : vector<8x128xi1>, vector<8x128xf32>
      %43 = arith.mulf %38, %42 : vector<8x128xf32>
      %44 = arith.addf %43, %25 : vector<8x128xf32>
      %45 = arith.mulf %43, %25 : vector<8x128xf32>
      %cst_14 = arith.constant 2.000000e+00 : f32
      %46 = vector.broadcast %cst_14 : f32 to vector<8x128xf32>
      %47 = arith.mulf %46, %45 : vector<8x128xf32>
      %48 = arith.subf %44, %47 : vector<8x128xf32>
      %cst_15 = arith.constant 0.000000e+00 : f32
      %49 = vector.broadcast %cst_15 : f32 to vector<8x128xf32>
      %50 = arith.maximumf %48, %49 : vector<8x128xf32>
      %51 = math.sqrt %50 : vector<8x128xf32>
      %52 = arith.mulf %50, %51 : vector<8x128xf32>
      %cst_16 = arith.constant 5.000000e-01 : f32
      %53 = vector.broadcast %cst_16 : f32 to vector<8x128xf32>
      %54 = arith.mulf %53, %25 : vector<8x128xf32>
      %cst_17 = arith.constant 7.500000e-01 : f32
      %55 = vector.broadcast %cst_17 : f32 to vector<8x128xf32>
      %56 = arith.subf %55, %54 : vector<8x128xf32>
      %57 = arith.mulf %35, %56 : vector<8x128xf32>
      %58 = arith.mulf %57, %52 : vector<8x128xf32>
      %cst_18 = arith.constant 0.000000e+00 : f32
      %59 = vector.broadcast %cst_18 : f32 to vector<8x128xf32>
      %60 = arith.select %21, %58, %59 : vector<8x128xi1>, vector<8x128xf32>
      %c0_19 = arith.constant 0 : index
      %c0_20 = arith.constant 0 : index
      %c0_21 = arith.constant 0 : index
      %61 = vector.load %arg4[%c0_19, %c0_20, %c0_21] : memref<1x8x128xf32, #tpu.memory_space<vmem>>, vector<1x8x128xf32>
      %62 = vector.shape_cast %61 : vector<1x8x128xf32> to vector<8x128xf32>
      %63 = vector.shape_cast %60 : vector<8x128xf32> to vector<1x8x128xf32>
      %cst_22 = arith.constant dense<0.000000e+00> : vector<8x128xf32>
      %64 = vector.multi_reduction <add>, %63, %cst_22 [0] : vector<1x8x128xf32> to vector<8x128xf32>
      %65 = arith.addf %62, %64 : vector<8x128xf32>
      %c0_23 = arith.constant 0 : index
      %c0_24 = arith.constant 0 : index
      %c0_25 = arith.constant 0 : index
      %66 = vector.load %arg4[%c0_23, %c0_24, %c0_25] : memref<1x8x128xf32, #tpu.memory_space<vmem>>, vector<1x8x128xf32>
      %67 = vector.shape_cast %66 : vector<1x8x128xf32> to vector<8x128xf32>
      %68 = vector.shape_cast %65 : vector<8x128xf32> to vector<1x8x128xf32>
      tpu.vector_store %arg4[%c0_23, %c0_24, %c0_25], %68 {strides = array<i32>} : memref<1x8x128xf32, #tpu.memory_space<vmem>>, vector<1x8x128xf32>,
    } else {
    }
    return
  }
  func.func @transform_0(%arg0: i32, %arg1: i32) -> (i32, i32) {
    %c1_i32 = arith.constant 1 : i32
    %0 = arith.muli %arg0, %c1_i32 : i32
    %1 = arith.addi %0, %arg1 : i32
    %c1_i32_0 = arith.constant 1 : i32
    %2 = arith.minsi %1, %c1_i32_0 : i32
    %c0_i32 = arith.constant 0 : i32
    %c0_i32_1 = arith.constant 0 : i32
    return %2, %c0_i32 : i32, i32
  }
  func.func @transform_1(%arg0: i32, %arg1: i32) -> (i32, i32) {
    %c1_i32 = arith.constant 1 : i32
    %0 = arith.muli %arg0, %c1_i32 : i32
    %1 = arith.addi %0, %arg1 : i32
    %c1_i32_0 = arith.constant 1 : i32
    %2 = arith.minsi %1, %c1_i32_0 : i32
    %c0_i32 = arith.constant 0 : i32
    %c0_i32_1 = arith.constant 0 : i32
    return %2, %c0_i32 : i32, i32
  }
  func.func @transform_2(%arg0: i32, %arg1: i32) -> (i32, i32, i32) {
    %c0_i32 = arith.constant 0 : i32
    %c0_i32_0 = arith.constant 0 : i32
    %c0_i32_1 = arith.constant 0 : i32
    return %arg0, %c0_i32, %c0_i32_0 : i32, i32, i32
  }
}

</mosaic_0001>

<llo_original>
// kernel: tpu_custom_call.1
$region0: #{tpu_custom_call.1}
  #allocation0 [shape = 'u32[]', space=smem, size = 0x4, offset = 0x4, fixed_abs, tag = 'smem constant byte address 0x4 - core index']
  #allocation1 [shape = 'u32[72,128]{1,0:T(1,128)}', space=vmem, size = 0x9000, scoped, tag = 'internal scratch']
  %s0 = inlined_call_operand.hbm [shape: f32[16,128], index: 0, kind: input, shape index: {}]
  %s1 = inlined_call_operand.hbm [shape: f32[16,128], index: 1, kind: input, shape index: {}]
  %s2 = inlined_call_operand.hbm [shape: f32[2,8,128], index: 2, kind: output, shape index: {}]
  %s3 = sld [smem:[#allocation0]]
  $region61: #{tpu_custom_call.1} parent=0
    _
  %s5 = ssub.s32 1, %s3
  %s6 = scalar_select 0, %s5, %s3
  $region1: #{tpu_custom_call.1} parent=0
    #allocation2 [shape = 'u8[8192]{0}', space=vmem, size = 0x2000, scoped, tag = 'input window, operand 0']
    #allocation3 [shape = 's32[2]{0}', space=sflag, size = 0x8, scoped, tag = 'scoped memory for tpu_custom_call.1']
    #allocation4 [shape = 's32[2]{0}', space=sflag, size = 0x8, scoped, tag = 'scoped memory for tpu_custom_call.1']
    #allocation5 [shape = 'u8[8192]{0}', space=vmem, size = 0x2000, scoped, tag = 'input window, operand 1']
    #allocation6 [shape = 's32[2]{0}', space=sflag, size = 0x8, scoped, tag = 'scoped memory for tpu_custom_call.1']
    #allocation7 [shape = 'u8[8192]{0}', space=vmem, size = 0x2000, scoped, tag = 'output window, operand 0']
    %7 = vsyncpa [#allocation3], 0
    %s8 = scalar_lea.sflag [#allocation3], 1
    %9 = vsyncpa %s8, 0
    %10 = vsyncpa [#allocation6], 0
    %s11 = scalar_lea.sflag [#allocation6], 1
    %12 = vsyncpa %s11, 0
    %13 = vsyncpa [#allocation4], 0
    %s14 = scalar_lea.sflag [#allocation4], 1
    %15 = vsyncpa %s14, 0
    loop: start=0, step=1, limit=4
    $region2: #{tpu_custom_call.1} parent=1 // loop_pre_header
      _
    $region3: #{tpu_custom_call.1} parent=1 // loop_header
      %s17 = sphi 0, %s21
      %p18 = scmp.ge.s32.totalorder %s17, 4
      %s24 = sphi 0, %s36
      %s25 = sphi 0, %s32
      %s26 = sphi 0, %s24
      %s27 = sphi 0, %s25
      %s28 = sphi 0, %s26
      %s29 = sphi 0, %s27
      %s45 = sphi 0, %s47
      %s48 = sphi 0, %s45
      %s49 = sphi 0, %s48
      %s65 = sphi 0, %s49
      %s77 = sphi 0, %s79
      %s80 = sphi 0, %s77
      %s81 = sphi 0, %s80
      %s97 = sphi 0, %s81
      %s103 = sphi 0, %s105
      %s106 = sphi 0, %s103
      %s107 = sphi 0, %s106
      %s123 = sphi 0, %s107
    $region4: #{tpu_custom_call.1} parent=1 // loop_header_branch
      %20 = sbr.rel (%p18) target = $region8
    $region5: #{tpu_custom_call.1} parent=1 // loop_body
      %s22 = ssub.s32 %s17, 1
      %s23 = ssub.s32 %s17, 2
      %s30 = sadd.s32 1, %s25
      %p31 = scmp.ge.s32.totalorder %s30, 1
      %s32 = scalar_select %p31, 0, %s30
      %s33 = sadd.s32 1, %s24
      %s34 = scalar_select %p31, %s33, %s24
      %p35 = scmp.ge.s32.totalorder %s34, 2
      %s36 = scalar_select %p35, 0, %s34
      %s37 = sadd.s32 %s24, %s25
      %p38 = scmp.lt.s32.totalorder %s37, 1
      %s39 = scalar_select %p38, %s37, 1
      %s40 = sadd.s32 %s36, %s32
      %p41 = scmp.lt.s32.totalorder %s40, 1
      %s42 = scalar_select %p41, %s40, 1
      %s43 = ssub.s32 %s39, %s42
      %p44 = scmp.eq.s32.totalorder %s43, 0
      %s46 = sadd.s32 %s45, 1
      %s47 = scalar_select %p44, %s45, %s46
      %p50 = pneg %p44
      %p51 = scmp.eq.s32.totalorder %s17, 1
      %p52 = por %p50, %p51
      %p53 = scmp.ne.s32.totalorder %s45, %s48
      %p54 = scmp.eq.s32.totalorder %s17, 0
      %p55 = por %p53, %p54
      %p56 = scmp.ne.s32.totalorder %s45, %s48
      %p57 = scmp.eq.s32.totalorder %s22, 1
      %p58 = por %p56, %p57
      %p59 = scmp.ne.s32.totalorder %s48, %s49
      %p60 = scmp.eq.s32.totalorder %s22, 0
      %p61 = por %p59, %p60
      %p62 = scmp.ne.s32.totalorder %s48, %s49
      %p63 = scmp.eq.s32.totalorder %s23, 1
      %p64 = por %p62, %p63
      %p66 = scmp.ne.s32.totalorder %s49, %s65
      %p67 = scmp.eq.s32.totalorder %s23, 0
      %p68 = por %p66, %p67
      %s69 = sadd.s32 %s24, %s25
      %p70 = scmp.lt.s32.totalorder %s69, 1
      %s71 = scalar_select %p70, %s69, 1
      %s72 = sadd.s32 %s36, %s32
      %p73 = scmp.lt.s32.totalorder %s72, 1
      %s74 = scalar_select %p73, %s72, 1
      %s75 = ssub.s32 %s71, %s74
      %p76 = scmp.eq.s32.totalorder %s75, 0
      %s78 = sadd.s32 %s77, 1
      %s79 = scalar_select %p76, %s77, %s78
      %p82 = pneg %p76
      %p83 = scmp.eq.s32.totalorder %s17, 1
      %p84 = por %p82, %p83
      %p85 = scmp.ne.s32.totalorder %s77, %s80
      %p86 = scmp.eq.s32.totalorder %s17, 0
      %p87 = por %p85, %p86
      %p88 = scmp.ne.s32.totalorder %s77, %s80
      %p89 = scmp.eq.s32.totalorder %s22, 1
      %p90 = por %p88, %p89
      %p91 = scmp.ne.s32.totalorder %s80, %s81
      %p92 = scmp.eq.s32.totalorder %s22, 0
      %p93 = por %p91, %p92
      %p94 = scmp.ne.s32.totalorder %s80, %s81
      %p95 = scmp.eq.s32.totalorder %s23, 1
      %p96 = por %p94, %p95
      %p98 = scmp.ne.s32.totalorder %s81, %s97
      %p99 = scmp.eq.s32.totalorder %s23, 0
      %p100 = por %p98, %p99
      %s101 = ssub.s32 %s24, %s36
      %p102 = scmp.eq.s32.totalorder %s101, 0
      %s104 = sadd.s32 %s103, 1
      %s105 = scalar_select %p102, %s103, %s104
      %p108 = pneg %p102
      %p109 = scmp.eq.s32.totalorder %s17, 1
      %p110 = por %p108, %p109
      %p111 = scmp.ne.s32.totalorder %s103, %s106
      %p112 = scmp.eq.s32.totalorder %s17, 0
      %p113 = por %p111, %p112
      %p114 = scmp.ne.s32.totalorder %s103, %s106
      %p115 = scmp.eq.s32.totalorder %s22, 1
      %p116 = por %p114, %p115
      %p117 = scmp.ne.s32.totalorder %s106, %s107
      %p118 = scmp.eq.s32.totalorder %s22, 0
      %p119 = por %p117, %p118
      %p120 = scmp.ne.s32.totalorder %s106, %s107
      %p121 = scmp.eq.s32.totalorder %s23, 1
      %p122 = por %p120, %p121
      %p124 = scmp.ne.s32.totalorder %s107, %s123
      %p125 = scmp.eq.s32.totalorder %s23, 0
      %p126 = por %p124, %p125
      %p127 = scmp.le.s32.totalorder 1, %s17
      %p128 = scmp.lt.s32.totalorder %s17, 3
      %p129 = pnand %p127, %p128
      %p130 = pneg %p129
      // Predicated region
      $region9: #{tpu_custom_call.1} parent=5 // pred_check
        _
      $region10: #{tpu_custom_call.1} parent=5 // pred_check_branch
        %132 = sbr.rel (%p129) target = $region12
      $region11: #{tpu_custom_call.1} parent=5 // pred_region
        %s133 = ssub.s32 %s17, 1
      $region12: #{tpu_custom_call.1} parent=5 // pred_fallthru
        _
      %p134 = scmp.lt.s32.totalorder %s17, 2
      // Predicated region
      $region13: #{tpu_custom_call.1} parent=5 // pred_check
        %p135 = pneg %p134
      $region14: #{tpu_custom_call.1} parent=5 // pred_check_branch
        %137 = sbr.rel (%p135) target = $region16
      $region15: #{tpu_custom_call.1} parent=5 // pred_region
        // Predicated region
        $region17: #{tpu_custom_call.1} parent=15 // pred_check
          %p138 = pneg %p55
        $region18: #{tpu_custom_call.1} parent=15 // pred_check_branch
          %140 = sbr.rel (%p138) target = $region20
        $region19: #{tpu_custom_call.1} parent=15 // pred_region
          %s141 = sand.u32 %s45, 1
          %s142 = scalar_lea.sflag [#allocation3], %s141
          %s143 = sand.u32 %s45, 1
          %s144 = smul.addr %s143, 8
          %s145 = scalar_lea.vmem [#allocation2], %s144
          %s146 = sadd.s32 %s24, %s25
          %p147 = scmp.lt.s32.totalorder %s146, 1
          %s148 = scalar_select %p147, %s146, 1
          %150 = vsyncadd %s142, 0
          %s151 = smul.addr %s148, 8
          %s152 = scalar_lea.hbm %s0, %s151
          %s154 = sshll.u32 %s152, 4
          %s155 = int_to_ptr.hbm [resolvable:$true] %s154
          %s156 = sshll.u32 %s145, 4
          %s157 = int_to_ptr.vmem [resolvable:$true] %s156
          %159 = dma.hbm_to_vmem [thread:$0]  %s155, 128, %s157, %s142
        $region20: #{tpu_custom_call.1} parent=15 // pred_fallthru
          _
        // Predicated region
        $region21: #{tpu_custom_call.1} parent=15 // pred_check
          %p160 = pneg %p87
        $region22: #{tpu_custom_call.1} parent=15 // pred_check_branch
          %162 = sbr.rel (%p160) target = $region24
        $region23: #{tpu_custom_call.1} parent=15 // pred_region
          %s163 = sand.u32 %s77, 1
          %s164 = scalar_lea.sflag [#allocation6], %s163
          %s165 = sand.u32 %s77, 1
          %s166 = smul.addr %s165, 8
          %s167 = scalar_lea.vmem [#allocation5], %s166
          %s168 = sadd.s32 %s24, %s25
          %p169 = scmp.lt.s32.totalorder %s168, 1
          %s170 = scalar_select %p169, %s168, 1
          %172 = vsyncadd %s164, 0
          %s173 = smul.addr %s170, 8
          %s174 = scalar_lea.hbm %s1, %s173
          %s176 = sshll.u32 %s174, 4
          %s177 = int_to_ptr.hbm [resolvable:$true] %s176
          %s178 = sshll.u32 %s167, 4
          %s179 = int_to_ptr.vmem [resolvable:$true] %s178
          %181 = dma.hbm_to_vmem [thread:$0]  %s177, 128, %s179, %s164
        $region24: #{tpu_custom_call.1} parent=15 // pred_fallthru
          _
      $region16: #{tpu_custom_call.1} parent=5 // pred_fallthru
        _
      %p182 = scmp.le.s32.totalorder 1, %s17
      %p183 = scmp.lt.s32.totalorder %s17, 3
      %p184 = pnand %p182, %p183
      %p185 = pneg %p184
      // Predicated region
      $region25: #{tpu_custom_call.1} parent=5 // pred_check
        _
      $region26: #{tpu_custom_call.1} parent=5 // pred_check_branch
        %187 = sbr.rel (%p184) target = $region28
      $region27: #{tpu_custom_call.1} parent=5 // pred_region
        %s188 = ssub.s32 %s17, 1
        %s189 = sand.u32 %s48, 1
        %s190 = scalar_lea.sflag [#allocation3], %s189
        %s191 = sand.u32 %s48, 1
        %s192 = smul.addr %s191, 8
        %s193 = scalar_lea.vmem [#allocation2], %s192
        // Predicated region
        $region29: #{tpu_custom_call.1} parent=27 // pred_check
          %p194 = pneg %p61
        $region30: #{tpu_custom_call.1} parent=27 // pred_check_branch
          %196 = sbr.rel (%p194) target = $region32
        $region31: #{tpu_custom_call.1} parent=27 // pred_region
          %198 = dma.done %s190, 128
        $region32: #{tpu_custom_call.1} parent=27 // pred_fallthru
          _
        %s199 = sand.u32 %s80, 1
        %s200 = scalar_lea.sflag [#allocation6], %s199
        %s201 = sand.u32 %s80, 1
        %s202 = smul.addr %s201, 8
        %s203 = scalar_lea.vmem [#allocation5], %s202
        // Predicated region
        $region33: #{tpu_custom_call.1} parent=27 // pred_check
          %p204 = pneg %p93
        $region34: #{tpu_custom_call.1} parent=27 // pred_check_branch
          %206 = sbr.rel (%p204) target = $region36
        $region35: #{tpu_custom_call.1} parent=27 // pred_region
          %208 = dma.done %s200, 128
        $region36: #{tpu_custom_call.1} parent=27 // pred_fallthru
          _
        %s209 = sand.u32 %s48, 1
        %s210 = scalar_lea.sflag [#allocation3], %s209
        %s211 = sand.u32 %s48, 1
        %s212 = smul.addr %s211, 8
        %s213 = scalar_lea.vmem [#allocation2], %s212
        %p214 = pneg %p61
        %p215 = pneg %p58
        %s216 = sand.u32 %s80, 1
        %s217 = scalar_lea.sflag [#allocation6], %s216
        %s218 = sand.u32 %s80, 1
        %s219 = smul.addr %s218, 8
        %s220 = scalar_lea.vmem [#allocation5], %s219
        %p221 = pneg %p93
        %p222 = pneg %p90
        %p223 = pneg %p119
        %p224 = pneg %p116
        %s225 = sand.u32 %s106, 1
        %s226 = scalar_lea.sflag [#allocation4], %s225
        %s227 = sand.u32 %s106, 1
        %s228 = smul.addr %s227, 8
        %s229 = scalar_lea.vmem [#allocation7], %s228
        %s230 = sadd.s32 %s26, %s27
        %p231 = scmp.lt.s32.totalorder %s230, 1
        %s232 = scalar_select %p231, %s230, 1
        %s233 = sadd.s32 %s26, %s27
        %p234 = scmp.lt.s32.totalorder %s233, 1
        %s235 = scalar_select %p234, %s233, 1
        %p236 = scmp.eq.s32.totalorder %s27, 0
        // Predicated region
        $region37: #{tpu_custom_call.1} parent=27 // pred_check
          %p237 = pneg %p236
        $region38: #{tpu_custom_call.1} parent=27 // pred_check_branch
          %239 = sbr.rel (%p237) target = $region40
        $region39: #{tpu_custom_call.1} parent=27 // pred_region
          %240 = vst [vmem:[%s229] sm:$0xff] 0.0
        $region40: #{tpu_custom_call.1} parent=27 // pred_fallthru
          _
        %v241 = vld [vmem:[%s193] sm:$0xff]
        %v242 = vld [vmem:[%s203] sm:$0xff]
        %s243 = sadd.s32 %s26, %s27
        %s244 = smul.u32 %s243, 1024
        %s245 = ssub.s32 2048, %s244
        %p246 = scmp.ge.s32.totalorder %s245, 1024
        // Predicated region
        $region41: #{tpu_custom_call.1} parent=27 // pred_check
          %p247 = pneg %p246
        $region42: #{tpu_custom_call.1} parent=27 // pred_check_branch
          %249 = sbr.rel (%p247) target = $region44
        $region43: #{tpu_custom_call.1} parent=27 // pred_region
          %v250 = vand.u32 2147483647, %v241
          %v251 = vsub.f32 0.0, %v250
          %v252 = vmul.f32 %v251, 1.442695
          %v253 = vpow.pop %v252
          %v254 = vmax.f32 %v241, 0.0
          %v255 = vmul.f32 %v241, %v242
          %v256 = vsub.f32 %v254, %v255
          %v257 = vadd.f32 %v253, 1.0
          %v258 = vlog2.pop %v257
          %v259 = vmul.f32 %v258, 0.6931472
          %v260 = vmul.f32 -0.5, %v253
          %v261 = vadd.f32 %v260, 1.0
          %v262 = vmul.f32 %v261, %v253
          %v263 = vand.u32 2147483647, %v253
          %vm264 = vcmp.lt.f32.partialorder %v263, 0.0004427343
          %v265 = vsel %vm264, %v262, %v259
          %v266 = vadd.f32 %v256, %v265
          %v267 = vadd.f32 %v253, 1.0
          %v268 = vrcp.pop %v267
          %vm269 = vcmp.ge.f32.partialorder %v241, 0.0
          %v270 = vsel %vm269, 1.0, %v253
          %v271 = vmul.f32 %v268, %v270
          %v272 = vadd.f32 %v271, %v242
          %v273 = vmul.f32 %v271, %v242
          %v274 = vmul.f32 %v273, 2.0
          %v275 = vsub.f32 %v272, %v274
          %v276 = vmax.f32 %v275, 0.0
          %v277 = vrsqrt.pop %v276
          %v278 = vmul.f32 %v277, %v276
          %v279 = vmul.f32 %v278, %v277
          %v280 = vmul.f32 0.5, %v279
          %v281 = vsub.f32 1.5, %v280
          %v282 = vmul.f32 %v277, %v281
          %v283 = vmul.f32 %v276, %v282
          %vm284 = vcmp.eq.f32.partialorder %v276, inf
          %v285 = vsel %vm284, %v276, %v283
          %vm286 = vcmp.eq.f32.partialorder %v276, 0.0
          %v287 = vand.u32 %v276, 2147483648
          %v288 = vsel %vm286, %v287, %v285
          %v289 = vmul.f32 %v276, %v288
          %v290 = vmul.f32 %v242, 0.5
          %v291 = vsub.f32 0.75, %v290
          %v292 = vmul.f32 %v266, %v291
          %v293 = vmul.f32 %v292, %v289
          %v294 = vld [vmem:[%s229] sm:$0xff]
          %v295 = vadd.f32 %v293, 0.0
          %v296 = vadd.f32 %v294, %v295
          %297 = vst [vmem:[%s229] sm:$0xff] %v296
        $region44: #{tpu_custom_call.1} parent=27 // pred_fallthru
          _
        %p298 = scmp.lt.s32.totalorder %s245, 1024
        // Predicated region
        $region45: #{tpu_custom_call.1} parent=27 // pred_check
          %p299 = pneg %p298
        $region46: #{tpu_custom_call.1} parent=27 // pred_check_branch
          %301 = sbr.rel (%p299) target = $region48
        $region47: #{tpu_custom_call.1} parent=27 // pred_region
          %v302 = vlaneseq
          %v303 = vshrl.u32 %v302, 7
          %v304 = vmul.u32 %v303, 128
          %v305 = vlaneseq
          %v306 = vand.u32 %v305, 127
          %v307 = vadd.s32 %v304, %v306
          %v308 = vstv %s245
          %vm309 = vcmp.lt.s32.totalorder %v307, %v308
          %v310 = vsel %vm309, %v241, 0.0
          %v311 = vsel %vm309, %v242, 1.0
          %v312 = vand.u32 2147483647, %v310
          %v313 = vsub.f32 0.0, %v312
          %v314 = vmul.f32 %v313, 1.442695
          %v315 = vpow.pop %v314
          %v316 = vmax.f32 %v310, 0.0
          %v317 = vmul.f32 %v310, %v311
          %v318 = vsub.f32 %v316, %v317
          %v319 = vadd.f32 %v315, 1.0
          %v320 = vlog2.pop %v319
          %v321 = vmul.f32 %v320, 0.6931472
          %v322 = vmul.f32 -0.5, %v315
          %v323 = vadd.f32 %v322, 1.0
          %v324 = vmul.f32 %v323, %v315
          %v325 = vand.u32 2147483647, %v315
          %vm326 = vcmp.lt.f32.partialorder %v325, 0.0004427343
          %v327 = vsel %vm326, %v324, %v321
          %v328 = vadd.f32 %v318, %v327
          %v329 = vadd.f32 %v315, 1.0
          %v330 = vrcp.pop %v329
          %vm331 = vcmp.ge.f32.partialorder %v310, 0.0
          %v332 = vsel %vm331, 1.0, %v315
          %v333 = vmul.f32 %v330, %v332
          %v334 = vadd.f32 %v333, %v311
          %v335 = vmul.f32 %v333, %v311
          %v336 = vmul.f32 %v335, 2.0
          %v337 = vsub.f32 %v334, %v336
          %v338 = vmax.f32 %v337, 0.0
          %v339 = vrsqrt.pop %v338
          %v340 = vmul.f32 %v339, %v338
          %v341 = vmul.f32 %v340, %v339
          %v342 = vmul.f32 0.5, %v341
          %v343 = vsub.f32 1.5, %v342
          %v344 = vmul.f32 %v339, %v343
          %v345 = vmul.f32 %v338, %v344
          %vm346 = vcmp.eq.f32.partialorder %v338, inf
          %v347 = vsel %vm346, %v338, %v345
          %vm348 = vcmp.eq.f32.partialorder %v338, 0.0
          %v349 = vand.u32 %v338, 2147483648
          %v350 = vsel %vm348, %v349, %v347
          %v351 = vmul.f32 %v338, %v350
          %v352 = vmul.f32 %v311, 0.5
          %v353 = vsub.f32 0.75, %v352
          %v354 = vmul.f32 %v328, %v353
          %v355 = vmul.f32 %v354, %v351
          %v356 = vsel %vm309, %v355, 0.0
          %v357 = vld [vmem:[%s229] sm:$0xff]
          %v358 = vadd.f32 %v356, 0.0
          %v359 = vadd.f32 %v357, %v358
          %360 = vst [vmem:[%s229] sm:$0xff] %v359
        $region48: #{tpu_custom_call.1} parent=27 // pred_fallthru
          _
        %s361 = sand.u32 %s106, 1
        %s362 = scalar_lea.sflag [#allocation4], %s361
        %s363 = sand.u32 %s106, 1
        %s364 = smul.addr %s363, 8
        %s365 = scalar_lea.vmem [#allocation7], %s364
        // Predicated region
        $region49: #{tpu_custom_call.1} parent=27 // pred_check
          %p366 = pneg %p116
        $region50: #{tpu_custom_call.1} parent=27 // pred_check_branch
          %368 = sbr.rel (%p366) target = $region52
        $region51: #{tpu_custom_call.1} parent=27 // pred_region
          %370 = vsyncadd %s362, 0
          %s371 = smul.addr %s26, 8
          %s372 = scalar_lea.hbm %s2, %s371
          %s374 = sshll.u32 %s365, 4
          %s375 = int_to_ptr.vmem [resolvable:$true] %s374
          %s376 = sshll.u32 %s372, 4
          %s377 = int_to_ptr.hbm [resolvable:$true] %s376
          %379 = dma.vmem_to_hbm [thread:$0]  %s375, 128, %s377, %s362
        $region52: #{tpu_custom_call.1} parent=27 // pred_fallthru
          _
      $region28: #{tpu_custom_call.1} parent=5 // pred_fallthru
        _
      %p380 = scmp.le.s32.totalorder 2, %s17
      // Predicated region
      $region53: #{tpu_custom_call.1} parent=5 // pred_check
        %p381 = pneg %p380
      $region54: #{tpu_custom_call.1} parent=5 // pred_check_branch
        %383 = sbr.rel (%p381) target = $region56
      $region55: #{tpu_custom_call.1} parent=5 // pred_region
        %s384 = ssub.s32 %s17, 2
        // Predicated region
        $region57: #{tpu_custom_call.1} parent=55 // pred_check
          %p385 = pneg %p122
        $region58: #{tpu_custom_call.1} parent=55 // pred_check_branch
          %387 = sbr.rel (%p385) target = $region60
        $region59: #{tpu_custom_call.1} parent=55 // pred_region
          %s388 = sand.u32 %s107, 1
          %s389 = scalar_lea.sflag [#allocation4], %s388
          %s390 = sand.u32 %s107, 1
          %s391 = smul.addr %s390, 8
          %s392 = scalar_lea.vmem [#allocation7], %s391
          %394 = dma.done %s389, 128
        $region60: #{tpu_custom_call.1} parent=55 // pred_fallthru
          _
      $region56: #{tpu_custom_call.1} parent=5 // pred_fallthru
        _
    $region6: #{tpu_custom_call.1} parent=1 // loop_footer
      %s21 = sadd.s32 1, %s17
    $region7: #{tpu_custom_call.1} parent=1 // loop_footer_branch
      %16 = sbr.rel target = $region3
    $region8: #{tpu_custom_call.1} parent=1 // loop_exit
      _
    %395 = vsyncpa [#allocation3], 1
    %s396 = scalar_lea.sflag [#allocation3], 1
    %397 = vsyncpa %s396, 1
    %398 = vsyncpa [#allocation6], 1
    %s399 = scalar_lea.sflag [#allocation6], 1
    %400 = vsyncpa %s399, 1
    %401 = vsyncpa [#allocation4], 1
    %s402 = scalar_lea.sflag [#allocation4], 1
    %403 = vsyncpa %s402, 1

</llo_original>
